<compile_context>
chip_gen: v7x
topology: tpu7x:2x2x1
jax: 0.10.0
libtpu: 0.0.40
codegen_flags: <defaults>
</compile_context>

<pallas_src>
import functools

import jax
import jax.numpy as jnp
from jax import lax
from jax.experimental import pallas as pl
from jax.experimental.pallas import tpu as pltpu


def _round_up(x, m):
    return ((x + m - 1) // m) * m


# ----------------------------------------------------------------------------
# Pallas kernel: likelihood-target score assembly + DSM prior loss +
# likelihood loss, reduced to per-split partial sums.
# ----------------------------------------------------------------------------
def _posterior_loss_kernel(s_prior_ref, target_ref, s_lik_ref,
                           vjp1_ref, vjp2_ref, vjp3_ref,
                           vhp1_ref, vhp2_ref, vhp3_ref,
                           scal_ref, out_ref, *, a):
    i = pl.program_id(1)          # inner (reduction) axis over batch tiles

    # The output block index only depends on the split axis, so it stays
    # resident across the inner axis and doubles as the accumulator:
    #   lane 0 = sum of prior (DSM) loss, lane 1 = sum of likelihood loss.
    @pl.when(i == 0)
    def _():
        out_ref[...] = jnp.zeros_like(out_ref)

    f32 = jnp.float32
    # In-kernel upcast: inputs may arrive in their producer dtype (e.g. bf16);
    # all arithmetic stays f32 (required on v5e, which has no bf16 VPU path).
    s_prior = s_prior_ref[...].astype(f32)      # (T, D)
    target = target_ref[...].astype(f32)
    s_lik = s_lik_ref[...].astype(f32)
    vjp1 = vjp1_ref[...].astype(f32)
    vjp2 = vjp2_ref[...].astype(f32)
    vjp3 = vjp3_ref[...].astype(f32)
    vhp1 = vhp1_ref[...].astype(f32)
    vhp2 = vhp2_ref[...].astype(f32)
    vhp3 = vhp3_ref[...].astype(f32)

    # Packed per-sample scalars: lane 0 = std, lane 1 = alpha.  Unpacked with
    # a masked lane reduction (XLU) rather than a lane-offset slice.
    scal = scal_ref[...].astype(f32)            # (T, 2)
    lane2 = lax.broadcasted_iota(jnp.int32, scal.shape, 1)
    std = jnp.sum(jnp.where(lane2 == 0, scal, 0.0), axis=1, keepdims=True)
    alpha = jnp.sum(jnp.where(lane2 == 1, scal, 0.0), axis=1, keepdims=True)

    a2 = a * a
    sig2 = std * std
    # likelihood_target: score = -a^2 (sigma^2 vhp1 + vjp1)
    #                            + (sigma^2 vhp2 + vjp2)
    #                            + a^2 (sigma^2 vhp3 + vjp3)
    score = (-a2 * (sig2 * vhp1 + vjp1)
             + (sig2 * vhp2 + vjp2)
             + a2 * (sig2 * vhp3 + vjp3))

    # Full-tile reductions straight to (1,1) partial sums (zero-padded rows
    # contribute exactly 0, so no masking is needed).
    prior_sum = 0.5 * jnp.sum((s_prior * std + target) ** 2, keepdims=True)
    lik_sum = jnp.sum((alpha * s_lik - score) ** 2, keepdims=True)

    lane = lax.broadcasted_iota(jnp.int32, out_ref.shape, 1)
    contrib = jnp.where(lane == 0,
                        jnp.broadcast_to(prior_sum, out_ref.shape),
                        jnp.where(lane == 1,
                                  jnp.broadcast_to(lik_sum, out_ref.shape),
                                  0.0))
    out_ref[...] += contrib


def posterior_loss_pallas(s_prior, target, s_lik, vjp1, vjp2, vjp3,
                          vhp1, vhp2, vhp3, std, alpha, *, a, lam,
                          tile_b=1024, interpret=False):
    """Returns (loss, prior_loss.mean(), lam * likelihood_loss.mean())."""
    B, D = s_prior.shape
    f32 = jnp.float32

    # Pack the two per-sample scalars into one (B, 2) input -> one small DMA.
    scalars = jnp.concatenate([std, alpha], axis=1)

    # --- batch tiling --------------------------------------------------------
    tile_b = max(8, min(_round_up(tile_b, 8), _round_up(B, 8)))
    n_tiles = pl.cdiv(B, tile_b)
    # v7x has 2 TensorCores: split the reduction into 2 independent partial
    # sums (leading "parallel" axis) combined in the wrapper.  Single split
    # when there is only one tile.
    n_split = 2 if n_tiles >= 2 else 1
    n_tiles = _round_up(n_tiles, n_split)
    steps = n_tiles // n_split
    b_pad = n_tiles * tile_b

    def pad(z):
        if z.shape[0] == b_pad:
            return z
        return jnp.pad(z, ((0, b_pad - z.shape[0]), (0, 0)))

    feats = [pad(z) for z in (s_prior, target, s_lik,
                              vjp1, vjp2, vjp3, vhp1, vhp2, vhp3)]
    scalars = pad(scalars)

    feat_spec = pl.BlockSpec((tile_b, D), lambda c, i: (c * steps + i, 0))
    scal_spec = pl.BlockSpec((tile_b, 2), lambda c, i: (c * steps + i, 0))
    out_spec = pl.BlockSpec((8, 128), lambda c, i: (c, 0))   # one merged output

    partials = pl.pallas_call(
        functools.partial(_posterior_loss_kernel, a=float(a)),
        out_shape=jax.ShapeDtypeStruct((n_split * 8, 128), f32),
        grid=(n_split, steps),
        in_specs=[feat_spec] * 9 + [scal_spec],
        out_specs=out_spec,
        compiler_params=pltpu.CompilerParams(
            dimension_semantics=("parallel", "arbitrary"),
            vmem_limit_bytes=32 * 1024 * 1024),
        interpret=interpret,
    )(*feats, scalars)

    partials = partials.reshape(n_split, 8, 128)[:, 0, :]
    inv_b = 1.0 / B
    prior_mean = jnp.sum(partials[:, 0]) * inv_b
    lik_mean = lam * jnp.sum(partials[:, 1]) * inv_b   # lam applied post-reduction
    loss = prior_mean + lik_mean                       # == mean(prior + lam*lik)
    return loss, prior_mean, lik_mean


# ----------------------------------------------------------------------------
# Small deterministic stand-ins for the SDE / networks the loss expects.
# ----------------------------------------------------------------------------
def _mlp_init(key, in_dim, hidden, out_dim):
    k1, k2 = jax.random.split(key)
    return dict(
        W1=jax.random.normal(k1, (in_dim, hidden), jnp.float32) / jnp.sqrt(in_dim),
        b1=jnp.zeros((hidden,), jnp.float32),
        W2=jax.random.normal(k2, (hidden, out_dim), jnp.float32) / jnp.sqrt(hidden),
        b2=jnp.zeros((out_dim,), jnp.float32))


def _mlp_apply(params, inp):
    h = jnp.tanh(inp @ params["W1"] + params["b1"])
    return h @ params["W2"] + params["b2"]


class SimpleVPSDE:
    def __init__(self, beta_min=0.1, beta_max=20.0):
        self.beta_min = beta_min
        self.beta_max = beta_max

    def beta(self, t):
        return self.beta_min + t * (self.beta_max - self.beta_min)

    def mean_weight(self, t):
        return jnp.exp(-0.25 * t ** 2 * (self.beta_max - self.beta_min)
                       - 0.5 * t * self.beta_min)

    def sample(self, t, x, noise):
        mw = self.mean_weight(t)
        std = jnp.sqrt(jnp.maximum(1.0 - mw ** 2, 1e-5))
        x_t = mw * x + std * noise
        g = jnp.sqrt(self.beta(t))
        return x_t, noise, std, g


class PosteriorDrift:
    """Stand-in for nets.PosteriorDrift: prior_net(x_t, t) / likelihood_net(x_t, y, t)."""

    def __init__(self, xdim, ydim, hidden, key):
        kp, kl = jax.random.split(key)
        self.prior_params = _mlp_init(kp, xdim + 1, hidden, xdim)
        self.lik_params = _mlp_init(kl, xdim + ydim + 1, hidden, xdim)

    def prior_net(self, x_t, t):
        return _mlp_apply(self.prior_params, jnp.concatenate([x_t, t], axis=1))

    def likelihood_net(self, x_t, y, t):
        return _mlp_apply(self.lik_params, jnp.concatenate([x_t, y, t], axis=1))


class PosteriorScoreModel:
    def __init__(self, xdim, ydim, hidden, key):
        self.a = PosteriorDrift(xdim, ydim, hidden, key)
        self.base_sde = SimpleVPSDE()


class ForwardModel:
    """Stand-in forward problem model: x (B, Dx) -> f(x) (B, Dy)."""

    def __init__(self, xdim, ydim, hidden, key):
        self.params = _mlp_init(key, xdim, hidden, ydim)

    def __call__(self, x):
        return _mlp_apply(self.params, x)


# ----------------------------------------------------------------------------
# PosteriorLoss.forward
# ----------------------------------------------------------------------------
def _posterior_intermediates(model, forward_model, x, y, t, noise, *, a, b):
    x_t, target, std, _g = model.base_sde.sample(t, x, noise)
    s_prior = model.a.prior_net(x_t, t)
    s_lik = model.a.likelihood_net(x_t, y, t)
    alpha = model.base_sde.mean_weight(t)
    x_0 = (x_t + std ** 2 * s_prior) / alpha

    # TODO(synk): torch.autograd.grad VJP/VHP chains of likelihood_target have
    # no Pallas equivalent; reproduced with jax.vjp and fed to the Pallas kernel.
    f_x, fm_vjp = jax.vjp(forward_model, x_0)
    prefactor = (a * f_x) ** 2 + b ** 2
    v1 = f_x / prefactor
    v2 = (y - f_x) / prefactor
    v3 = (y - f_x) ** 2 * f_x / prefactor
    vjp1, = fm_vjp(v1)
    vjp2, = fm_vjp(v2)
    vjp3, = fm_vjp(v3)

    _, pn_vjp = jax.vjp(lambda xt: model.a.prior_net(xt, t), x_t)
    vhp1, = pn_vjp(vjp1)
    vhp2, = pn_vjp(vjp2)
    vhp3, = pn_vjp(vjp3)

    return (s_prior, target, s_lik, vjp1, vjp2, vjp3,
            vhp1, vhp2, vhp3, std, alpha)


def posterior_loss_forward(model, forward_model, x, y, t, noise, *, a, b, lam):
    inter = _posterior_intermediates(model, forward_model, x, y, t, noise,
                                     a=a, b=b)
    loss, prior_mean, lik_mean = posterior_loss_pallas(*inter, a=a, lam=lam)
    return loss, {'PriorLoss': prior_mean, 'LikelihoodLoss': lik_mean}


def posterior_loss_reference(model, forward_model, x, y, t, noise, *, a, b, lam):
    (s_prior, target, s_lik, vjp1, vjp2, vjp3,
     vhp1, vhp2, vhp3, std, alpha) = _posterior_intermediates(
        model, forward_model, x, y, t, noise, a=a, b=b)
    prior_loss = 0.5 * jnp.sum((s_prior * std + target) ** 2, axis=1)
    sig2 = std ** 2
    a2 = a ** 2
    score = (-a2 * (sig2 * vhp1 + vjp1) + (sig2 * vhp2 + vjp2)
             + a2 * (sig2 * vhp3 + vjp3))
    lik_loss = jnp.sum((alpha * s_lik - score) ** 2, axis=1)
    loss = jnp.mean(prior_loss + lam * lik_loss)
    return loss, prior_loss.mean(), lam * lik_loss.mean()


# ----------------------------------------------------------------------------
if __name__ == "__main__":
    B, XDIM, YDIM, HIDDEN = 8, 16, 8, 32
    A, B_PARAM, LAM = 1.0, 0.5, 0.5

    key = jax.random.PRNGKey(0)
    k_model, k_fwd, kx, ky, kt, kn = jax.random.split(key, 6)

    model = PosteriorScoreModel(XDIM, YDIM, HIDDEN, k_model)
    forward_model = ForwardModel(XDIM, YDIM, HIDDEN, k_fwd)

    x = jax.random.normal(kx, (B, XDIM), jnp.float32)
    y = jax.random.normal(ky, (B, YDIM), jnp.float32)
    t = jax.random.uniform(kt, (B, 1), jnp.float32, 0.01, 1.0)
    noise = jax.random.normal(kn, (B, XDIM), jnp.float32)

    run = jax.jit(functools.partial(posterior_loss_forward, model, forward_model,
                                    a=A, b=B_PARAM, lam=LAM))
    loss, aux = run(x, y, t, noise)
    jax.block_until_ready(loss)
    jax.block_until_ready(aux['PriorLoss'])
    jax.block_until_ready(aux['LikelihoodLoss'])

    # Cross-check the fused Pallas loss against a pure-JAX reference.
    ref_loss, ref_prior, ref_lik = posterior_loss_reference(
        model, forward_model, x, y, t, noise, a=A, b=B_PARAM, lam=LAM)
    assert jnp.allclose(loss, ref_loss, rtol=1e-3, atol=1e-3), (loss, ref_loss)
    assert jnp.allclose(aux['PriorLoss'], ref_prior, rtol=1e-3, atol=1e-3)
    assert jnp.allclose(aux['LikelihoodLoss'], ref_lik, rtol=1e-3, atol=1e-3)

    print("KERNEL_OK")
</pallas_src>

<mosaic_0001>
module attributes {stable_mosaic.version = 11 : i64} {
  func.func @_posterior_loss_kernel(%arg0: i32, %arg1: i32, %arg2: memref<8x16xf32, #tpu.memory_space<vmem>>, %arg3: memref<8x16xf32, #tpu.memory_space<vmem>>, %arg4: memref<8x16xf32, #tpu.memory_space<vmem>>, %arg5: memref<8x16xf32, #tpu.memory_space<vmem>>, %arg6: memref<8x16xf32, #tpu.memory_space<vmem>>, %arg7: memref<8x16xf32, #tpu.memory_space<vmem>>, %arg8: memref<8x16xf32, #tpu.memory_space<vmem>>, %arg9: memref<8x16xf32, #tpu.memory_space<vmem>>, %arg10: memref<8x16xf32, #tpu.memory_space<vmem>>, %arg11: memref<8x2xf32, #tpu.memory_space<vmem>>, %arg12: memref<8x128xf32, #tpu.memory_space<vmem>>) attributes {dimension_semantics = [#tpu.dimension_semantics<parallel>, #tpu.dimension_semantics<arbitrary>], iteration_bounds = array<i64: 1, 1>, scalar_prefetch = 0 : i64, scratch_operands = 0 : i64, tpu.core_type = #tpu.core_type<tc>, window_params = [{transform_indices = @transform_0, window_bounds = array<i64: 8, 16>}, {transform_indices = @transform_1, window_bounds = array<i64: 8, 16>}, {transform_indices = @transform_2, window_bounds = array<i64: 8, 16>}, {transform_indices = @transform_3, window_bounds = array<i64: 8, 16>}, {transform_indices = @transform_4, window_bounds = array<i64: 8, 16>}, {transform_indices = @transform_5, window_bounds = array<i64: 8, 16>}, {transform_indices = @transform_6, window_bounds = array<i64: 8, 16>}, {transform_indices = @transform_7, window_bounds = array<i64: 8, 16>}, {transform_indices = @transform_8, window_bounds = array<i64: 8, 16>}, {transform_indices = @transform_9, window_bounds = array<i64: 8, 2>}, {transform_indices = @transform_10, window_bounds = array<i64: 8, 128>}]} {
    %c0_i32 = arith.constant 0 : i32
    %0 = arith.cmpi eq, %arg1, %c0_i32 : i32
    %1 = arith.extui %0 : i1 to i32
    %c0_i32_0 = arith.constant 0 : i32
    %2 = arith.cmpi ne, %1, %c0_i32_0 : i32
    scf.if %2 {
      %cst_36 = arith.constant 0.000000e+00 : f32
      %77 = vector.broadcast %cst_36 : f32 to vector<8x128xf32>
      %c0_37 = arith.constant 0 : index
      %c0_38 = arith.constant 0 : index
      %78 = vector.load %arg12[%c0_37, %c0_38] : memref<8x128xf32, #tpu.memory_space<vmem>>, vector<8x128xf32>
      tpu.vector_store %arg12[%c0_37, %c0_38], %77 {strides = array<i32>} : memref<8x128xf32, #tpu.memory_space<vmem>>, vector<8x128xf32>,
    } else {
    }
    %c0 = arith.constant 0 : index
    %c0_1 = arith.constant 0 : index
    %3 = vector.load %arg2[%c0, %c0_1] : memref<8x16xf32, #tpu.memory_space<vmem>>, vector<8x16xf32>
    %c0_2 = arith.constant 0 : index
    %c0_3 = arith.constant 0 : index
    %4 = vector.load %arg3[%c0_2, %c0_3] : memref<8x16xf32, #tpu.memory_space<vmem>>, vector<8x16xf32>
    %c0_4 = arith.constant 0 : index
    %c0_5 = arith.constant 0 : index
    %5 = vector.load %arg4[%c0_4, %c0_5] : memref<8x16xf32, #tpu.memory_space<vmem>>, vector<8x16xf32>
    %c0_6 = arith.constant 0 : index
    %c0_7 = arith.constant 0 : index
    %6 = vector.load %arg5[%c0_6, %c0_7] : memref<8x16xf32, #tpu.memory_space<vmem>>, vector<8x16xf32>
    %c0_8 = arith.constant 0 : index
    %c0_9 = arith.constant 0 : index
    %7 = vector.load %arg6[%c0_8, %c0_9] : memref<8x16xf32, #tpu.memory_space<vmem>>, vector<8x16xf32>
    %c0_10 = arith.constant 0 : index
    %c0_11 = arith.constant 0 : index
    %8 = vector.load %arg7[%c0_10, %c0_11] : memref<8x16xf32, #tpu.memory_space<vmem>>, vector<8x16xf32>
    %c0_12 = arith.constant 0 : index
    %c0_13 = arith.constant 0 : index
    %9 = vector.load %arg8[%c0_12, %c0_13] : memref<8x16xf32, #tpu.memory_space<vmem>>, vector<8x16xf32>
    %c0_14 = arith.constant 0 : index
    %c0_15 = arith.constant 0 : index
    %10 = vector.load %arg9[%c0_14, %c0_15] : memref<8x16xf32, #tpu.memory_space<vmem>>, vector<8x16xf32>
    %c0_16 = arith.constant 0 : index
    %c0_17 = arith.constant 0 : index
    %11 = vector.load %arg10[%c0_16, %c0_17] : memref<8x16xf32, #tpu.memory_space<vmem>>, vector<8x16xf32>
    %c0_18 = arith.constant 0 : index
    %c0_19 = arith.constant 0 : index
    %12 = vector.load %arg11[%c0_18, %c0_19] : memref<8x2xf32, #tpu.memory_space<vmem>>, vector<8x2xf32>
    %13 = tpu.iota {dimensions = array<i32: 1>} : vector<8x2xi32>
    %c0_i32_20 = arith.constant 0 : i32
    %14 = vector.broadcast %c0_i32_20 : i32 to vector<8x2xi32>
    %15 = arith.cmpi eq, %13, %14 : vector<8x2xi32>
    %cst = arith.constant 0.000000e+00 : f32
    %16 = vector.broadcast %cst : f32 to vector<8x2xf32>
    %17 = arith.select %15, %12, %16 : vector<8x2xi1>, vector<8x2xf32>
    %cst_21 = arith.constant dense<0.000000e+00> : vector<8xf32>
    %18 = vector.multi_reduction <add>, %17, %cst_21 [1] : vector<8x2xf32> to vector<8xf32>
    %19 = vector.shape_cast %18 : vector<8xf32> to vector<8x1xf32>
    %c1_i32 = arith.constant 1 : i32
    %20 = vector.broadcast %c1_i32 : i32 to vector<8x2xi32>
    %21 = arith.cmpi eq, %13, %20 : vector<8x2xi32>
    %cst_22 = arith.constant 0.000000e+00 : f32
    %22 = vector.broadcast %cst_22 : f32 to vector<8x2xf32>
    %23 = arith.select %21, %12, %22 : vector<8x2xi1>, vector<8x2xf32>
    %cst_23 = arith.constant dense<0.000000e+00> : vector<8xf32>
    %24 = vector.multi_reduction <add>, %23, %cst_23 [1] : vector<8x2xf32> to vector<8xf32>
    %25 = vector.shape_cast %24 : vector<8xf32> to vector<8x1xf32>
    %26 = arith.mulf %19, %19 : vector<8x1xf32>
    %27 = vector.broadcast %26 : vector<8x1xf32> to vector<8x16xf32>
    %28 = arith.mulf %27, %9 : vector<8x16xf32>
    %29 = arith.addf %28, %6 : vector<8x16xf32>
    %cst_24 = arith.constant -1.000000e+00 : f32
    %30 = vector.broadcast %cst_24 : f32 to vector<8x16xf32>
    %31 = arith.mulf %30, %29 : vector<8x16xf32>
    %32 = vector.broadcast %26 : vector<8x1xf32> to vector<8x16xf32>
    %33 = arith.mulf %32, %10 : vector<8x16xf32>
    %34 = arith.addf %33, %7 : vector<8x16xf32>
    %35 = arith.addf %31, %34 : vector<8x16xf32>
    %36 = vector.broadcast %26 : vector<8x1xf32> to vector<8x16xf32>
    %37 = arith.mulf %36, %11 : vector<8x16xf32>
    %38 = arith.addf %37, %8 : vector<8x16xf32>
    %cst_25 = arith.constant 1.000000e+00 : f32
    %39 = vector.broadcast %cst_25 : f32 to vector<8x16xf32>
    %40 = arith.mulf %39, %38 : vector<8x16xf32>
    %41 = arith.addf %35, %40 : vector<8x16xf32>
    %42 = vector.broadcast %19 : vector<8x1xf32> to vector<8x16xf32>
    %43 = arith.mulf %3, %42 : vector<8x16xf32>
    %44 = arith.addf %43, %4 : vector<8x16xf32>
    %45 = arith.mulf %44, %44 : vector<8x16xf32>
    %46 = vector.shape_cast %45 : vector<8x16xf32> to vector<1x8x16xf32>
    %cst_26 = arith.constant dense<0.000000e+00> : vector<1xf32>
    %47 = vector.multi_reduction <add>, %46, %cst_26 [1, 2] : vector<1x8x16xf32> to vector<1xf32>
    %48 = vector.shape_cast %47 : vector<1xf32> to vector<1x1x1xf32>
    %49 = vector.extract %48[0, 0, 0] : f32 from vector<1x1x1xf32>
    %50 = vector.broadcast %49 : f32 to vector<1x1xf32>
    %cst_27 = arith.constant 5.000000e-01 : f32
    %51 = vector.broadcast %cst_27 : f32 to vector<1x1xf32>
    %52 = arith.mulf %51, %50 : vector<1x1xf32>
    %53 = vector.broadcast %25 : vector<8x1xf32> to vector<8x16xf32>
    %54 = arith.mulf %53, %5 : vector<8x16xf32>
    %55 = arith.subf %54, %41 : vector<8x16xf32>
    %56 = arith.mulf %55, %55 : vector<8x16xf32>
    %57 = vector.shape_cast %56 : vector<8x16xf32> to vector<1x8x16xf32>
    %cst_28 = arith.constant dense<0.000000e+00> : vector<1xf32>
    %58 = vector.multi_reduction <add>, %57, %cst_28 [1, 2] : vector<1x8x16xf32> to vector<1xf32>
    %59 = vector.shape_cast %58 : vector<1xf32> to vector<1x1x1xf32>
    %60 = vector.extract %59[0, 0, 0] : f32 from vector<1x1x1xf32>
    %61 = vector.broadcast %60 : f32 to vector<1x1xf32>
    %62 = tpu.iota {dimensions = array<i32: 1>} : vector<8x128xi32>
    %c0_i32_29 = arith.constant 0 : i32
    %63 = vector.broadcast %c0_i32_29 : i32 to vector<8x128xi32>
    %64 = arith.cmpi eq, %62, %63 : vector<8x128xi32>
    %65 = vector.shape_cast %52 : vector<1x1xf32> to vector<1x1xf32>
    %66 = vector.broadcast %65 : vector<1x1xf32> to vector<8x128xf32>
    %c1_i32_30 = arith.constant 1 : i32
    %67 = vector.broadcast %c1_i32_30 : i32 to vector<8x128xi32>
    %68 = arith.cmpi eq, %62, %67 : vector<8x128xi32>
    %69 = vector.shape_cast %61 : vector<1x1xf32> to vector<1x1xf32>
    %70 = vector.broadcast %69 : vector<1x1xf32> to vector<8x128xf32>
    %cst_31 = arith.constant 0.000000e+00 : f32
    %71 = vector.broadcast %cst_31 : f32 to vector<8x128xf32>
    %72 = arith.select %68, %70, %71 : vector<8x128xi1>, vector<8x128xf32>
    %73 = arith.select %64, %66, %72 : vector<8x128xi1>, vector<8x128xf32>
    %c0_32 = arith.constant 0 : index
    %c0_33 = arith.constant 0 : index
    %74 = vector.load %arg12[%c0_32, %c0_33] : memref<8x128xf32, #tpu.memory_space<vmem>>, vector<8x128xf32>
    %75 = arith.addf %74, %73 : vector<8x128xf32>
    %c0_34 = arith.constant 0 : index
    %c0_35 = arith.constant 0 : index
    %76 = vector.load %arg12[%c0_34, %c0_35] : memref<8x128xf32, #tpu.memory_space<vmem>>, vector<8x128xf32>
    tpu.vector_store %arg12[%c0_34, %c0_35], %75 {strides = array<i32>} : memref<8x128xf32, #tpu.memory_space<vmem>>, vector<8x128xf32>,
    return
  }
  func.func @transform_0(%arg0: i32, %arg1: i32) -> (i32, i32) {
    %c1_i32 = arith.constant 1 : i32
    %0 = arith.muli %arg0, %c1_i32 : i32
    %1 = arith.addi %0, %arg1 : i32
    %c0_i32 = arith.constant 0 : i32
    %c0_i32_0 = arith.constant 0 : i32
    return %1, %c0_i32 : i32, i32
  }
  func.func @transform_1(%arg0: i32, %arg1: i32) -> (i32, i32) {
    %c1_i32 = arith.constant 1 : i32
    %0 = arith.muli %arg0, %c1_i32 : i32
    %1 = arith.addi %0, %arg1 : i32
    %c0_i32 = arith.constant 0 : i32
    %c0_i32_0 = arith.constant 0 : i32
    return %1, %c0_i32 : i32, i32
  }
  func.func @transform_2(%arg0: i32, %arg1: i32) -> (i32, i32) {
    %c1_i32 = arith.constant 1 : i32
    %0 = arith.muli %arg0, %c1_i32 : i32
    %1 = arith.addi %0, %arg1 : i32
    %c0_i32 = arith.constant 0 : i32
    %c0_i32_0 = arith.constant 0 : i32
    return %1, %c0_i32 : i32, i32
  }
  func.func @transform_3(%arg0: i32, %arg1: i32) -> (i32, i32) {
    %c1_i32 = arith.constant 1 : i32
    %0 = arith.muli %arg0, %c1_i32 : i32
    %1 = arith.addi %0, %arg1 : i32
    %c0_i32 = arith.constant 0 : i32
    %c0_i32_0 = arith.constant 0 : i32
    return %1, %c0_i32 : i32, i32
  }
  func.func @transform_4(%arg0: i32, %arg1: i32) -> (i32, i32) {
    %c1_i32 = arith.constant 1 : i32
    %0 = arith.muli %arg0, %c1_i32 : i32
    %1 = arith.addi %0, %arg1 : i32
    %c0_i32 = arith.constant 0 : i32
    %c0_i32_0 = arith.constant 0 : i32
    return %1, %c0_i32 : i32, i32
  }
  func.func @transform_5(%arg0: i32, %arg1: i32) -> (i32, i32) {
    %c1_i32 = arith.constant 1 : i32
    %0 = arith.muli %arg0, %c1_i32 : i32
    %1 = arith.addi %0, %arg1 : i32
    %c0_i32 = arith.constant 0 : i32
    %c0_i32_0 = arith.constant 0 : i32
    return %1, %c0_i32 : i32, i32
  }
  func.func @transform_6(%arg0: i32, %arg1: i32) -> (i32, i32) {
    %c1_i32 = arith.constant 1 : i32
    %0 = arith.muli %arg0, %c1_i32 : i32
    %1 = arith.addi %0, %arg1 : i32
    %c0_i32 = arith.constant 0 : i32
    %c0_i32_0 = arith.constant 0 : i32
    return %1, %c0_i32 : i32, i32
  }
  func.func @transform_7(%arg0: i32, %arg1: i32) -> (i32, i32) {
    %c1_i32 = arith.constant 1 : i32
    %0 = arith.muli %arg0, %c1_i32 : i32
    %1 = arith.addi %0, %arg1 : i32
    %c0_i32 = arith.constant 0 : i32
    %c0_i32_0 = arith.constant 0 : i32
    return %1, %c0_i32 : i32, i32
  }
  func.func @transform_8(%arg0: i32, %arg1: i32) -> (i32, i32) {
    %c1_i32 = arith.constant 1 : i32
    %0 = arith.muli %arg0, %c1_i32 : i32
    %1 = arith.addi %0, %arg1 : i32
    %c0_i32 = arith.constant 0 : i32
    %c0_i32_0 = arith.constant 0 : i32
    return %1, %c0_i32 : i32, i32
  }
  func.func @transform_9(%arg0: i32, %arg1: i32) -> (i32, i32) {
    %c1_i32 = arith.constant 1 : i32
    %0 = arith.muli %arg0, %c1_i32 : i32
    %1 = arith.addi %0, %arg1 : i32
    %c0_i32 = arith.constant 0 : i32
    %c0_i32_0 = arith.constant 0 : i32
    return %1, %c0_i32 : i32, i32
  }
  func.func @transform_10(%arg0: i32, %arg1: i32) -> (i32, i32) {
    %c0_i32 = arith.constant 0 : i32
    %c0_i32_0 = arith.constant 0 : i32
    return %arg0, %c0_i32 : i32, i32
  }
}

</mosaic_0001>

<llo_original>
// kernel: posterior_loss_forward.1
$region0: #{posterior_loss_forward.1}
  #allocation0 [shape = 'u32[]', space=smem, size = 0x4, offset = 0x4, fixed_abs, tag = 'smem constant byte address 0x4 - core index']
  #allocation1 [shape = 'u32[144,128]{1,0:T(1,128)}', space=vmem, size = 0x12000, scoped, tag = 'internal scratch']
  %s0 = inlined_call_operand.vmem [shape: f32[8,16], index: 0, kind: input, shape index: {}]
  %s1 = inlined_call_operand.vmem [shape: f32[8,16], index: 1, kind: input, shape index: {}]
  %s2 = inlined_call_operand.vmem [shape: f32[8,16], index: 2, kind: input, shape index: {}]
  %s3 = inlined_call_operand.vmem [shape: f32[8,16], index: 3, kind: input, shape index: {}]
  %s4 = inlined_call_operand.vmem [shape: f32[8,16], index: 4, kind: input, shape index: {}]
  %s5 = inlined_call_operand.vmem [shape: f32[8,16], index: 5, kind: input, shape index: {}]
  %s6 = inlined_call_operand.vmem [shape: f32[8,16], index: 6, kind: input, shape index: {}]
  %s7 = inlined_call_operand.vmem [shape: f32[8,16], index: 7, kind: input, shape index: {}]
  %s8 = inlined_call_operand.vmem [shape: f32[8,16], index: 8, kind: input, shape index: {}]
  %s9 = inlined_call_operand.vmem [shape: f32[8,2], index: 9, kind: input, shape index: {}]
  %s10 = inlined_call_operand.vmem [shape: f32[8,128], index: 10, kind: output, shape index: {}]
  %s11 = sld [smem:[#allocation0]]
  $region54: #{posterior_loss_forward.1} parent=0
    _
  %s13 = ssub.s32 1, %s11
  %s14 = scalar_select 0, %s13, %s11
  // Predicated region
  $region2: #{posterior_loss_forward.1} parent=0 // pred_check
    _
  $region3: #{posterior_loss_forward.1} parent=0 // pred_check_branch
    %16 = sbr.rel (0) target = $region5
  $region4: #{posterior_loss_forward.1} parent=0 // pred_region
    %s17 = sadd.s32 0, 0
    %p18 = scmp.lt.s32.totalorder %s17, 0
    %s19 = scalar_select %p18, %s17, 0
    %s20 = smul.addr %s19, 8
    %s21 = scalar_lea.vmem %s0, %s20
    %s22 = sadd.s32 0, 0
  $region5: #{posterior_loss_forward.1} parent=0 // pred_fallthru
    _
  // Predicated region
  $region6: #{posterior_loss_forward.1} parent=0 // pred_check
    _
  $region7: #{posterior_loss_forward.1} parent=0 // pred_check_branch
    %24 = sbr.rel (0) target = $region9
  $region8: #{posterior_loss_forward.1} parent=0 // pred_region
    %s25 = sadd.s32 0, 0
    %p26 = scmp.lt.s32.totalorder %s25, 0
    %s27 = scalar_select %p26, %s25, 0
    %s28 = smul.addr %s27, 8
    %s29 = scalar_lea.vmem %s1, %s28
    %s30 = sadd.s32 0, 0
  $region9: #{posterior_loss_forward.1} parent=0 // pred_fallthru
    _
  // Predicated region
  $region10: #{posterior_loss_forward.1} parent=0 // pred_check
    _
  $region11: #{posterior_loss_forward.1} parent=0 // pred_check_branch
    %32 = sbr.rel (0) target = $region13
  $region12: #{posterior_loss_forward.1} parent=0 // pred_region
    %s33 = sadd.s32 0, 0
    %p34 = scmp.lt.s32.totalorder %s33, 0
    %s35 = scalar_select %p34, %s33, 0
    %s36 = smul.addr %s35, 8
    %s37 = scalar_lea.vmem %s2, %s36
    %s38 = sadd.s32 0, 0
  $region13: #{posterior_loss_forward.1} parent=0 // pred_fallthru
    _
  // Predicated region
  $region14: #{posterior_loss_forward.1} parent=0 // pred_check
    _
  $region15: #{posterior_loss_forward.1} parent=0 // pred_check_branch
    %40 = sbr.rel (0) target = $region17
  $region16: #{posterior_loss_forward.1} parent=0 // pred_region
    %s41 = sadd.s32 0, 0
    %p42 = scmp.lt.s32.totalorder %s41, 0
    %s43 = scalar_select %p42, %s41, 0
    %s44 = smul.addr %s43, 8
    %s45 = scalar_lea.vmem %s3, %s44
    %s46 = sadd.s32 0, 0
  $region17: #{posterior_loss_forward.1} parent=0 // pred_fallthru
    _
  // Predicated region
  $region18: #{posterior_loss_forward.1} parent=0 // pred_check
    _
  $region19: #{posterior_loss_forward.1} parent=0 // pred_check_branch
    %48 = sbr.rel (0) target = $region21
  $region20: #{posterior_loss_forward.1} parent=0 // pred_region
    %s49 = sadd.s32 0, 0
    %p50 = scmp.lt.s32.totalorder %s49, 0
    %s51 = scalar_select %p50, %s49, 0
    %s52 = smul.addr %s51, 8
    %s53 = scalar_lea.vmem %s4, %s52
    %s54 = sadd.s32 0, 0
  $region21: #{posterior_loss_forward.1} parent=0 // pred_fallthru
    _
  // Predicated region
  $region22: #{posterior_loss_forward.1} parent=0 // pred_check
    _
  $region23: #{posterior_loss_forward.1} parent=0 // pred_check_branch
    %56 = sbr.rel (0) target = $region25
  $region24: #{posterior_loss_forward.1} parent=0 // pred_region
    %s57 = sadd.s32 0, 0
    %p58 = scmp.lt.s32.totalorder %s57, 0
    %s59 = scalar_select %p58, %s57, 0
    %s60 = smul.addr %s59, 8
    %s61 = scalar_lea.vmem %s5, %s60
    %s62 = sadd.s32 0, 0
  $region25: #{posterior_loss_forward.1} parent=0 // pred_fallthru
    _
  // Predicated region
  $region26: #{posterior_loss_forward.1} parent=0 // pred_check
    _
  $region27: #{posterior_loss_forward.1} parent=0 // pred_check_branch
    %64 = sbr.rel (0) target = $region29
  $region28: #{posterior_loss_forward.1} parent=0 // pred_region
    %s65 = sadd.s32 0, 0
    %p66 = scmp.lt.s32.totalorder %s65, 0
    %s67 = scalar_select %p66, %s65, 0
    %s68 = smul.addr %s67, 8
    %s69 = scalar_lea.vmem %s6, %s68
    %s70 = sadd.s32 0, 0
  $region29: #{posterior_loss_forward.1} parent=0 // pred_fallthru
    _
  // Predicated region
  $region30: #{posterior_loss_forward.1} parent=0 // pred_check
    _
  $region31: #{posterior_loss_forward.1} parent=0 // pred_check_branch
    %72 = sbr.rel (0) target = $region33
  $region32: #{posterior_loss_forward.1} parent=0 // pred_region
    %s73 = sadd.s32 0, 0
    %p74 = scmp.lt.s32.totalorder %s73, 0
    %s75 = scalar_select %p74, %s73, 0
    %s76 = smul.addr %s75, 8
    %s77 = scalar_lea.vmem %s7, %s76
    %s78 = sadd.s32 0, 0
  $region33: #{posterior_loss_forward.1} parent=0 // pred_fallthru
    _
  // Predicated region
  $region34: #{posterior_loss_forward.1} parent=0 // pred_check
    _
  $region35: #{posterior_loss_forward.1} parent=0 // pred_check_branch
    %80 = sbr.rel (0) target = $region37
  $region36: #{posterior_loss_forward.1} parent=0 // pred_region
    %s81 = sadd.s32 0, 0
    %p82 = scmp.lt.s32.totalorder %s81, 0
    %s83 = scalar_select %p82, %s81, 0
    %s84 = smul.addr %s83, 8
    %s85 = scalar_lea.vmem %s8, %s84
    %s86 = sadd.s32 0, 0
  $region37: #{posterior_loss_forward.1} parent=0 // pred_fallthru
    _
  // Predicated region
  $region38: #{posterior_loss_forward.1} parent=0 // pred_check
    _
  $region39: #{posterior_loss_forward.1} parent=0 // pred_check_branch
    %88 = sbr.rel (0) target = $region41
  $region40: #{posterior_loss_forward.1} parent=0 // pred_region
    %s89 = sadd.s32 0, 0
    %p90 = scmp.lt.s32.totalorder %s89, 0
    %s91 = scalar_select %p90, %s89, 0
    %s92 = smul.addr %s91, 8
    %s93 = scalar_lea.vmem %s9, %s92
    %s94 = sadd.s32 0, 0
  $region41: #{posterior_loss_forward.1} parent=0 // pred_fallthru
    _
  %s95 = sadd.s32 0, 0
  %p96 = scmp.lt.s32.totalorder %s95, 0
  %s97 = scalar_select %p96, %s95, 0
  %s98 = smul.addr %s97, 8
  %s99 = scalar_lea.vmem %s0, %s98
  %s100 = sadd.s32 0, 0
  %p101 = scmp.lt.s32.totalorder %s100, 0
  %s102 = scalar_select %p101, %s100, 0
  %s103 = smul.addr %s102, 8
  %s104 = scalar_lea.vmem %s1, %s103
  %s105 = sadd.s32 0, 0
  %p106 = scmp.lt.s32.totalorder %s105, 0
  %s107 = scalar_select %p106, %s105, 0
  %s108 = smul.addr %s107, 8
  %s109 = scalar_lea.vmem %s2, %s108
  %s110 = sadd.s32 0, 0
  %p111 = scmp.lt.s32.totalorder %s110, 0
  %s112 = scalar_select %p111, %s110, 0
  %s113 = smul.addr %s112, 8
  %s114 = scalar_lea.vmem %s3, %s113
  %s115 = sadd.s32 0, 0
  %p116 = scmp.lt.s32.totalorder %s115, 0
  %s117 = scalar_select %p116, %s115, 0
  %s118 = smul.addr %s117, 8
  %s119 = scalar_lea.vmem %s4, %s118
  %s120 = sadd.s32 0, 0
  %p121 = scmp.lt.s32.totalorder %s120, 0
  %s122 = scalar_select %p121, %s120, 0
  %s123 = smul.addr %s122, 8
  %s124 = scalar_lea.vmem %s5, %s123
  %s125 = sadd.s32 0, 0
  %p126 = scmp.lt.s32.totalorder %s125, 0
  %s127 = scalar_select %p126, %s125, 0
  %s128 = smul.addr %s127, 8
  %s129 = scalar_lea.vmem %s6, %s128
  %s130 = sadd.s32 0, 0
  %p131 = scmp.lt.s32.totalorder %s130, 0
  %s132 = scalar_select %p131, %s130, 0
  %s133 = smul.addr %s132, 8
  %s134 = scalar_lea.vmem %s7, %s133
  %s135 = sadd.s32 0, 0
  %p136 = scmp.lt.s32.totalorder %s135, 0
  %s137 = scalar_select %p136, %s135, 0
  %s138 = smul.addr %s137, 8
  %s139 = scalar_lea.vmem %s8, %s138
  %s140 = sadd.s32 0, 0
  %p141 = scmp.lt.s32.totalorder %s140, 0
  %s142 = scalar_select %p141, %s140, 0
  %s143 = smul.addr %s142, 8
  %s144 = scalar_lea.vmem %s9, %s143
  %s145 = sadd.s32 0, 0
  %p146 = scmp.lt.s32.totalorder %s145, 0
  %s147 = scalar_select %p146, %s145, 0
  %s148 = smul.addr %s147, 8
  %s149 = scalar_lea.vmem %s0, %s148
  %s150 = sadd.s32 0, 0
  %s151 = sadd.s32 0, 0
  %p152 = scmp.lt.s32.totalorder %s151, 0
  %s153 = scalar_select %p152, %s151, 0
  %s154 = smul.addr %s153, 8
  %s155 = scalar_lea.vmem %s1, %s154
  %s156 = sadd.s32 0, 0
  %s157 = sadd.s32 0, 0
  %p158 = scmp.lt.s32.totalorder %s157, 0
  %s159 = scalar_select %p158, %s157, 0
  %s160 = smul.addr %s159, 8
  %s161 = scalar_lea.vmem %s2, %s160
  %s162 = sadd.s32 0, 0
  %s163 = sadd.s32 0, 0
  %p164 = scmp.lt.s32.totalorder %s163, 0
  %s165 = scalar_select %p164, %s163, 0
  %s166 = smul.addr %s165, 8
  %s167 = scalar_lea.vmem %s3, %s166
  %s168 = sadd.s32 0, 0
  %s169 = sadd.s32 0, 0
  %p170 = scmp.lt.s32.totalorder %s169, 0
  %s171 = scalar_select %p170, %s169, 0
  %s172 = smul.addr %s171, 8
  %s173 = scalar_lea.vmem %s4, %s172
  %s174 = sadd.s32 0, 0
  %s175 = sadd.s32 0, 0
  %p176 = scmp.lt.s32.totalorder %s175, 0
  %s177 = scalar_select %p176, %s175, 0
  %s178 = smul.addr %s177, 8
  %s179 = scalar_lea.vmem %s5, %s178
  %s180 = sadd.s32 0, 0
  %s181 = sadd.s32 0, 0
  %p182 = scmp.lt.s32.totalorder %s181, 0
  %s183 = scalar_select %p182, %s181, 0
  %s184 = smul.addr %s183, 8
  %s185 = scalar_lea.vmem %s6, %s184
  %s186 = sadd.s32 0, 0
  %s187 = sadd.s32 0, 0
  %p188 = scmp.lt.s32.totalorder %s187, 0
  %s189 = scalar_select %p188, %s187, 0
  %s190 = smul.addr %s189, 8
  %s191 = scalar_lea.vmem %s7, %s190
  %s192 = sadd.s32 0, 0
  %s193 = sadd.s32 0, 0
  %p194 = scmp.lt.s32.totalorder %s193, 0
  %s195 = scalar_select %p194, %s193, 0
  %s196 = smul.addr %s195, 8
  %s197 = scalar_lea.vmem %s8, %s196
  %s198 = sadd.s32 0, 0
  %s199 = sadd.s32 0, 0
  %p200 = scmp.lt.s32.totalorder %s199, 0
  %s201 = scalar_select %p200, %s199, 0
  %s202 = smul.addr %s201, 8
  %s203 = scalar_lea.vmem %s9, %s202
  %s204 = sadd.s32 0, 0
  %p205 = scmp.eq.s32.totalorder 0, 0
  // Predicated region
  $region42: #{posterior_loss_forward.1} parent=0 // pred_check
    %p206 = pneg %p205
  $region43: #{posterior_loss_forward.1} parent=0 // pred_check_branch
    %208 = sbr.rel (%p206) target = $region45
  $region44: #{posterior_loss_forward.1} parent=0 // pred_region
    %209 = vst [vmem:[%s10] sm:$0xff] 0.0
  $region45: #{posterior_loss_forward.1} parent=0 // pred_fallthru
    _
  %v210 = vld [vmem:[%s149] sm:$0xff]
  %v211 = vld [vmem:[%s155] sm:$0xff]
  %v212 = vld [vmem:[%s161] sm:$0xff]
  %v213 = vld [vmem:[%s167] sm:$0xff]
  %v214 = vld [vmem:[%s173] sm:$0xff]
  %v215 = vld [vmem:[%s179] sm:$0xff]
  %v216 = vld [vmem:[%s185] sm:$0xff]
  %v217 = vld [vmem:[%s191] sm:$0xff]
  %v218 = vld [vmem:[%s197] sm:$0xff]
  %v219 = vld [vmem:[%s203] sm:$0xff]
  %v220 = vlaneseq
  %v221 = vand.u32 %v220, 127
  %vm222 = vcmp.eq.s32.totalorder %v221, 0
  %v223 = vsel %vm222, %v219, 0.0
  %vm224 = vcmask 15360
  %v225 = vsel %vm224, %v223, 0.0
  %226 = vadd.xlane.f32.xlu0 %v225
  %v227 = vpop.xlane.xlu0 %226
  %vm228 = vcmp.eq.s32.totalorder %v221, 1
  %v229 = vsel %vm228, %v219, 0.0
  %v230 = vsel %vm224, %v229, 0.0
  %231 = vadd.xlane.f32.xlu0 %v230
  %v232 = vpop.xlane.xlu0 %231
  %v233 = vmul.f32 %v227, %v227
  %v234 = vmul.f32 %v233, %v216
  %v235 = vadd.f32 %v234, %v213
  %v236 = vmul.f32 %v235, -1.0
  %v237 = vmul.f32 %v233, %v217
  %v238 = vadd.f32 %v237, %v214
  %v239 = vadd.f32 %v236, %v238
  %v240 = vmul.f32 %v233, %v218
  %v241 = vadd.f32 %v240, %v215
  %v242 = vadd.f32 %v239, %v241
  %v243 = vmul.f32 %v210, %v227
  %v244 = vadd.f32 %v243, %v211
  %v245 = vmul.f32 %v244, %v244
  %vm246 = vcmask 130048
  %v247 = vsel %vm246, %v245, 0.0
  %248 = vadd.xlane.f32.xlu0 %v247
  %v249 = vpop.xlane.xlu0 %248
  %v250 = vrot.slane %v249, 4
  %v251 = vadd.f32 %v249, %v250
  %v252 = vrot.slane %v251, 2
  %v253 = vadd.f32 %v251, %v252
  %v254 = vrot.slane %v253, 1
  %v255 = vadd.f32 %v253, %v254
  %s256 = vtos %v255
  %v257 = vstv %s256
  %v258 = vmul.f32 %v257, 0.5
  %v259 = vmul.f32 %v232, %v212
  %v260 = vsub.f32 %v259, %v242
  %v261 = vmul.f32 %v260, %v260
  %v262 = vsel %vm246, %v261, 0.0
  %263 = vadd.xlane.f32.xlu0 %v262
  %v264 = vpop.xlane.xlu0 %263
  %v265 = vrot.slane %v264, 4
  %v266 = vadd.f32 %v264, %v265
  %v267 = vrot.slane %v266, 2
  %v268 = vadd.f32 %v266, %v267
  %v269 = vrot.slane %v268, 1
  %v270 = vadd.f32 %v268, %v269
  %s271 = vtos %v270
  %v272 = vstv %s271
  %v273 = vsel %vm228, %v272, 0.0
  %v274 = vsel %vm222, %v258, %v273
  %v275 = vld [vmem:[%s10] sm:$0xff]
  %v276 = vadd.f32 %v275, %v274
  %277 = vst [vmem:[%s10] sm:$0xff] %v276
  // Predicated region
  $region46: #{posterior_loss_forward.1} parent=0 // pred_check
    _
  $region47: #{posterior_loss_forward.1} parent=0 // pred_check_branch
    %279 = sbr.rel (0) target = $region49
  $region48: #{posterior_loss_forward.1} parent=0 // pred_region
    _
  $region49: #{posterior_loss_forward.1} parent=0 // pred_fallthru
    _
  // Predicated region
  $region50: #{posterior_loss_forward.1} parent=0 // pred_check
    _
  $region51: #{posterior_loss_forward.1} parent=0 // pred_check_branch
    %281 = sbr.rel (0) target = $region53
  $region52: #{posterior_loss_forward.1} parent=0 // pred_region
    _
  $region53: #{posterior_loss_forward.1} parent=0 // pred_fallthru
    _

</llo_original>
